<compile_context>
chip_gen: v7x
topology: tpu7x:2x2x1
jax: 0.10.0
libtpu: 0.0.40
codegen_flags: <defaults>
</compile_context>

<pallas_src>
import jax
import jax.numpy as jnp
from jax.experimental import pallas as pl
from jax.experimental.pallas import tpu as pltpu

_LANE = 128
_SUBLANE = 8


def _round_up(x, m):
    return (x + m - 1) // m * m


def _make_mlp_kernel(num_linears, relu_after):
    """Fused MLP kernel.

    Ref layout: (x_ref, w0, b0, w1, b1, ..., wK, bK, out_ref).
    relu_after[i] == True -> apply ReLU after linear i.
    """

    def kernel(*refs):
        x_ref = refs[0]
        out_ref = refs[-1]
        h = x_ref[...]
        for i in range(num_linears):
            w = refs[1 + 2 * i][...]
            b = refs[2 + 2 * i][...]  # (1, out_i), broadcasts over rows
            # MXU matmul in the params' native dtype, f32 accumulation.
            # (astype to an identical dtype is a no-op — no extra VPU copies.)
            h = jnp.dot(h.astype(w.dtype), w, preferred_element_type=jnp.float32)
            # Bias add / ReLU in f32 on the VPU.
            h = h + b.astype(jnp.float32)
            if relu_after[i]:
                h = jnp.maximum(h, 0.0)
        out_ref[...] = h.astype(out_ref.dtype)

    return kernel


def mlp_forward(x, weights, biases, relu_after, *, tile_b=512):
    """Runs the fused MLP Pallas kernel.

    x:        (B, D_in) float32
    weights:  list of (D_i, D_{i+1}) arrays (already transposed from PyTorch)
    biases:   list of (1, D_{i+1}) arrays
    """
    B, d_in = x.shape
    out_dim = weights[-1].shape[1]
    num_linears = len(weights)

    weights = list(weights)
    biases = list(biases)

    # --- lane-dense final store: pad last projection to a multiple of 128 ---
    out_pad = _round_up(out_dim, _LANE)
    if out_pad != out_dim:
        weights[-1] = jnp.pad(weights[-1], ((0, 0), (0, out_pad - out_dim)))
        biases[-1] = jnp.pad(biases[-1], ((0, 0), (0, out_pad - out_dim)))

    # --- batch tiling: big row tiles when B is large, one padded block else ---
    tile_b = min(tile_b, _round_up(B, _SUBLANE))
    b_pad = _round_up(B, tile_b)
    if b_pad != B:
        x = jnp.pad(x, ((0, b_pad - B), (0, 0)))
    grid = (b_pad // tile_b,)

    # --- specs: x/out stream per batch tile, params resident in VMEM ---
    in_specs = [pl.BlockSpec((tile_b, d_in), lambda i: (i, 0))]
    operands = [x]
    for w, b in zip(weights, biases):
        in_specs.append(pl.BlockSpec(w.shape, lambda i: (0, 0)))
        in_specs.append(pl.BlockSpec(b.shape, lambda i: (0, 0)))
        operands.append(w)
        operands.append(b)
    out_specs = pl.BlockSpec((tile_b, out_pad), lambda i: (i, 0))

    # --- VMEM budget (sized against the tightest, v7x-style 64 MiB VMEM) ---
    param_bytes = sum(int(a.size) * a.dtype.itemsize for a in weights + biases)
    dims = [d_in] + [w.shape[1] for w in weights]
    stream_bytes = 2 * tile_b * (d_in * x.dtype.itemsize + out_pad * 4)  # dbl-buffered
    interm_bytes = 2 * tile_b * max(dims) * 4  # f32 intermediates
    vmem_est = param_bytes + stream_bytes + interm_bytes
    vmem_limit = int(min(max(2 * vmem_est, 32 * 1024 * 1024), 56 * 1024 * 1024))

    flops = 2 * b_pad * sum(w.shape[0] * w.shape[1] for w in weights)
    bytes_accessed = (
        int(x.size) * x.dtype.itemsize + param_bytes + b_pad * out_pad * 4
    )

    kernel = _make_mlp_kernel(num_linears, tuple(relu_after))

    out = pl.pallas_call(
        kernel,
        out_shape=jax.ShapeDtypeStruct((b_pad, out_pad), jnp.float32),
        grid=grid,
        in_specs=in_specs,
        out_specs=out_specs,
        compiler_params=pltpu.CompilerParams(
            dimension_semantics=("parallel",),
            vmem_limit_bytes=vmem_limit,
        ),
        cost_estimate=pl.CostEstimate(
            flops=flops, transcendentals=0, bytes_accessed=bytes_accessed
        ),
    )(*operands)

    # Drop batch/lane padding, then torch.squeeze(x) (glue, not compute).
    out = out[:B, :out_dim]
    return jnp.squeeze(out)


def init_mlp_params(key, input_shape, output_shape, layer_sizes):
    """Deterministic parameter init mirroring the PyTorch module's shapes."""
    dims = [input_shape] + list(layer_sizes) + [output_shape]
    n_linears = len(dims) - 1
    weights, biases = [], []
    for i in range(n_linears):
        key, wk, bk = jax.random.split(key, 3)
        fan_in, fan_out = dims[i], dims[i + 1]
        bound = 1.0 / jnp.sqrt(fan_in)
        # PyTorch stores weight as (out, in); we store transposed (in, out).
        w = jax.random.uniform(wk, (fan_in, fan_out), jnp.float32, -bound, bound)
        b = jax.random.uniform(bk, (1, fan_out), jnp.float32, -bound, bound)
        weights.append(w)
        biases.append(b)
    n = len(layer_sizes)
    # ReLU after linears 0..n-2; none after linear n-1 and the final linear n.
    relu_after = [i < n - 1 for i in range(n_linears)]
    return weights, biases, relu_after


def mlp_reference(x, weights, biases, relu_after):
    """Pure-JAX reference for correctness checking."""
    h = x
    for i, (w, b) in enumerate(zip(weights, biases)):
        h = h @ w + b
        if relu_after[i]:
            h = jnp.maximum(h, 0.0)
    return jnp.squeeze(h)


if __name__ == "__main__":
    # Small, forward-consistent shapes.
    batch = 8
    input_shape = 16
    layer_sizes = [32, 64]
    output_shape = 1  # exercises the torch.squeeze() at the end -> (batch,)

    key = jax.random.PRNGKey(0)
    key, xkey = jax.random.split(key)
    x = jax.random.normal(xkey, (batch, input_shape), dtype=jnp.float32)

    weights, biases, relu_after = init_mlp_params(
        key, input_shape, output_shape, layer_sizes
    )

    out = mlp_forward(x, weights, biases, relu_after)
    out = jax.block_until_ready(out)

    ref = mlp_reference(x, weights, biases, relu_after)
    assert out.shape == ref.shape, (out.shape, ref.shape)
    assert jnp.allclose(out, ref, atol=1e-5, rtol=1e-5), "mismatch vs reference"

    print("KERNEL_OK")
</pallas_src>

<mosaic_0001>
module attributes {stable_mosaic.version = 11 : i64} {
  func.func @kernel(%arg0: i32, %arg1: memref<8x16xf32, #tpu.memory_space<vmem>>, %arg2: memref<16x32xf32, #tpu.memory_space<vmem>>, %arg3: memref<1x32xf32, #tpu.memory_space<vmem>>, %arg4: memref<32x64xf32, #tpu.memory_space<vmem>>, %arg5: memref<1x64xf32, #tpu.memory_space<vmem>>, %arg6: memref<64x128xf32, #tpu.memory_space<vmem>>, %arg7: memref<1x128xf32, #tpu.memory_space<vmem>>, %arg8: memref<8x128xf32, #tpu.memory_space<vmem>>) attributes {dimension_semantics = [#tpu.dimension_semantics<parallel>], iteration_bounds = array<i64: 1>, scalar_prefetch = 0 : i64, scratch_operands = 0 : i64, tpu.core_type = #tpu.core_type<tc>, window_params = [{transform_indices = @transform_0, window_bounds = array<i64: 8, 16>}, {pipeline_mode = #tpu.pipeline_mode<synchronous>, transform_indices = @transform_1, window_bounds = array<i64: 16, 32>}, {pipeline_mode = #tpu.pipeline_mode<synchronous>, transform_indices = @transform_2, window_bounds = array<i64: 1, 32>}, {pipeline_mode = #tpu.pipeline_mode<synchronous>, transform_indices = @transform_3, window_bounds = array<i64: 32, 64>}, {pipeline_mode = #tpu.pipeline_mode<synchronous>, transform_indices = @transform_4, window_bounds = array<i64: 1, 64>}, {pipeline_mode = #tpu.pipeline_mode<synchronous>, transform_indices = @transform_5, window_bounds = array<i64: 64, 128>}, {pipeline_mode = #tpu.pipeline_mode<synchronous>, transform_indices = @transform_6, window_bounds = array<i64: 1, 128>}, {transform_indices = @transform_7, window_bounds = array<i64: 8, 128>}]} {
    %c0 = arith.constant 0 : index
    %c0_0 = arith.constant 0 : index
    %0 = vector.load %arg1[%c0, %c0_0] : memref<8x16xf32, #tpu.memory_space<vmem>>, vector<8x16xf32>
    %c0_1 = arith.constant 0 : index
    %c0_2 = arith.constant 0 : index
    %1 = vector.load %arg2[%c0_1, %c0_2] : memref<16x32xf32, #tpu.memory_space<vmem>>, vector<16x32xf32>
    %c0_3 = arith.constant 0 : index
    %c0_4 = arith.constant 0 : index
    %2 = vector.load %arg3[%c0_3, %c0_4] : memref<1x32xf32, #tpu.memory_space<vmem>>, vector<1x32xf32>
    %cst = arith.constant dense<0.000000e+00> : vector<8x32xf32>
    %3 = tpu.matmul %0, %1, %cst {dimension_numbers = #tpu.dot_dimension_numbers<[1], [0], [0], [1], [0, 0, 1, 1], [], []>} : vector<8x16xf32>, vector<16x32xf32>, vector<8x32xf32> -> vector<8x32xf32>
    %4 = vector.broadcast %2 : vector<1x32xf32> to vector<8x32xf32>
    %5 = arith.addf %3, %4 : vector<8x32xf32>
    %cst_5 = arith.constant 0.000000e+00 : f32
    %6 = vector.broadcast %cst_5 : f32 to vector<8x32xf32>
    %7 = arith.maximumf %5, %6 : vector<8x32xf32>
    %c0_6 = arith.constant 0 : index
    %c0_7 = arith.constant 0 : index
    %8 = vector.load %arg4[%c0_6, %c0_7] : memref<32x64xf32, #tpu.memory_space<vmem>>, vector<32x64xf32>
    %c0_8 = arith.constant 0 : index
    %c0_9 = arith.constant 0 : index
    %9 = vector.load %arg5[%c0_8, %c0_9] : memref<1x64xf32, #tpu.memory_space<vmem>>, vector<1x64xf32>
    %cst_10 = arith.constant dense<0.000000e+00> : vector<8x64xf32>
    %10 = tpu.matmul %7, %8, %cst_10 {dimension_numbers = #tpu.dot_dimension_numbers<[1], [0], [0], [1], [0, 0, 1, 1], [], []>} : vector<8x32xf32>, vector<32x64xf32>, vector<8x64xf32> -> vector<8x64xf32>
    %11 = vector.broadcast %9 : vector<1x64xf32> to vector<8x64xf32>
    %12 = arith.addf %10, %11 : vector<8x64xf32>
    %c0_11 = arith.constant 0 : index
    %c0_12 = arith.constant 0 : index
    %13 = vector.load %arg6[%c0_11, %c0_12] : memref<64x128xf32, #tpu.memory_space<vmem>>, vector<64x128xf32>
    %c0_13 = arith.constant 0 : index
    %c0_14 = arith.constant 0 : index
    %14 = vector.load %arg7[%c0_13, %c0_14] : memref<1x128xf32, #tpu.memory_space<vmem>>, vector<1x128xf32>
    %cst_15 = arith.constant dense<0.000000e+00> : vector<8x128xf32>
    %15 = tpu.matmul %12, %13, %cst_15 {dimension_numbers = #tpu.dot_dimension_numbers<[1], [0], [0], [1], [0, 0, 1, 1], [], []>} : vector<8x64xf32>, vector<64x128xf32>, vector<8x128xf32> -> vector<8x128xf32>
    %16 = vector.broadcast %14 : vector<1x128xf32> to vector<8x128xf32>
    %17 = arith.addf %15, %16 : vector<8x128xf32>
    %c0_16 = arith.constant 0 : index
    %c0_17 = arith.constant 0 : index
    %18 = vector.load %arg8[%c0_16, %c0_17] : memref<8x128xf32, #tpu.memory_space<vmem>>, vector<8x128xf32>
    tpu.vector_store %arg8[%c0_16, %c0_17], %17 {strides = array<i32>} : memref<8x128xf32, #tpu.memory_space<vmem>>, vector<8x128xf32>,
    return
  }
  func.func @transform_0(%arg0: i32) -> (i32, i32) {
    %c0_i32 = arith.constant 0 : i32
    %c0_i32_0 = arith.constant 0 : i32
    return %arg0, %c0_i32 : i32, i32
  }
  func.func @transform_1(%arg0: i32) -> (i32, i32) {
    %c0_i32 = arith.constant 0 : i32
    %c0_i32_0 = arith.constant 0 : i32
    %c0_i32_1 = arith.constant 0 : i32
    return %c0_i32, %c0_i32_0 : i32, i32
  }
  func.func @transform_2(%arg0: i32) -> (i32, i32) {
    %c0_i32 = arith.constant 0 : i32
    %c0_i32_0 = arith.constant 0 : i32
    %c0_i32_1 = arith.constant 0 : i32
    return %c0_i32, %c0_i32_0 : i32, i32
  }
  func.func @transform_3(%arg0: i32) -> (i32, i32) {
    %c0_i32 = arith.constant 0 : i32
    %c0_i32_0 = arith.constant 0 : i32
    %c0_i32_1 = arith.constant 0 : i32
    return %c0_i32, %c0_i32_0 : i32, i32
  }
  func.func @transform_4(%arg0: i32) -> (i32, i32) {
    %c0_i32 = arith.constant 0 : i32
    %c0_i32_0 = arith.constant 0 : i32
    %c0_i32_1 = arith.constant 0 : i32
    return %c0_i32, %c0_i32_0 : i32, i32
  }
  func.func @transform_5(%arg0: i32) -> (i32, i32) {
    %c0_i32 = arith.constant 0 : i32
    %c0_i32_0 = arith.constant 0 : i32
    %c0_i32_1 = arith.constant 0 : i32
    return %c0_i32, %c0_i32_0 : i32, i32
  }
  func.func @transform_6(%arg0: i32) -> (i32, i32) {
    %c0_i32 = arith.constant 0 : i32
    %c0_i32_0 = arith.constant 0 : i32
    %c0_i32_1 = arith.constant 0 : i32
    return %c0_i32, %c0_i32_0 : i32, i32
  }
  func.func @transform_7(%arg0: i32) -> (i32, i32) {
    %c0_i32 = arith.constant 0 : i32
    %c0_i32_0 = arith.constant 0 : i32
    return %arg0, %c0_i32 : i32, i32
  }
}

</mosaic_0001>

<llo_original>
// kernel: tpu_custom_call.1
$region0: #{tpu_custom_call.1}
  #allocation0 [shape = 'u32[]', space=smem, size = 0x4, offset = 0x4, fixed_abs, tag = 'smem constant byte address 0x4 - core index']
  #allocation1 [shape = 'u32[144,128]{1,0:T(1,128)}', space=vmem, size = 0x12000, scoped, tag = 'internal scratch']
  %s0 = inlined_call_operand.hbm [shape: f32[8,16], index: 0, kind: input, shape index: {}]
  %s1 = inlined_call_operand.hbm [shape: f32[16,32], index: 1, kind: input, shape index: {}]
  %s2 = inlined_call_operand.vmem [shape: f32[1,32], index: 2, kind: input, shape index: {}]
  %s3 = inlined_call_operand.hbm [shape: f32[32,64], index: 3, kind: input, shape index: {}]
  %s4 = inlined_call_operand.vmem [shape: f32[1,64], index: 4, kind: input, shape index: {}]
  %s5 = inlined_call_operand.hbm [shape: f32[64,128], index: 5, kind: input, shape index: {}]
  %s6 = inlined_call_operand.vmem [shape: f32[1,128], index: 6, kind: input, shape index: {}]
  %s7 = inlined_call_operand.hbm [shape: f32[8,128], index: 7, kind: output, shape index: {}]
  %s8 = sld [smem:[#allocation0]]
  $region54: #{tpu_custom_call.1} parent=0
    _
  %s10 = ssub.s32 1, %s8
  %s11 = scalar_select 0, %s10, %s8
  $region1: #{tpu_custom_call.1} parent=0
    #allocation2 [shape = 'u8[4096]{0}', space=vmem, size = 0x1000, scoped, tag = 'input window, operand 0, single buffered']
    #allocation3 [shape = 's32[1]{0}', space=sflag, size = 0x4, scoped, tag = 'scoped memory for tpu_custom_call.1']
    #allocation4 [shape = 's32[1]{0}', space=sflag, size = 0x4, scoped, tag = 'scoped memory for tpu_custom_call.1']
    #allocation5 [shape = 'u8[8192]{0}', space=vmem, size = 0x2000, scoped, tag = 'input window, operand 1, single buffered']
    #allocation6 [shape = 's32[1]{0}', space=sflag, size = 0x4, scoped, tag = 'scoped memory for tpu_custom_call.1']
    #allocation7 [shape = 'u8[16384]{0}', space=vmem, size = 0x4000, scoped, tag = 'input window, operand 3, single buffered']
    #allocation8 [shape = 'u8[32768]{0}', space=vmem, size = 0x8000, scoped, tag = 'input window, operand 5, single buffered']
    #allocation9 [shape = 's32[1]{0}', space=sflag, size = 0x4, scoped, tag = 'scoped memory for tpu_custom_call.1']
    #allocation10 [shape = 'u8[4096]{0}', space=vmem, size = 0x1000, scoped, tag = 'output window, operand 0, single buffered']
    %12 = vsyncpa [#allocation3], 0
    %13 = vsyncpa [#allocation6], 0
    %14 = vsyncpa [#allocation9], 0
    %15 = vsyncpa [#allocation4], 0
    // Predicated region
    $region2: #{tpu_custom_call.1} parent=1 // pred_check
      _
    $region3: #{tpu_custom_call.1} parent=1 // pred_check_branch
      %17 = sbr.rel (0) target = $region5
    $region4: #{tpu_custom_call.1} parent=1 // pred_region
      %s19 = ssub.s32 128, 128
      %20 = vsyncadd [#allocation3], %s19
      %s22 = sshll.u32 [#allocation2], 4
      %s23 = int_to_ptr.vmem [resolvable:$true] %s22
      %25 = dma.hbm_to_vmem [thread:$0]  %s0, 128, %s23, [#allocation3]
    $region5: #{tpu_custom_call.1} parent=1 // pred_fallthru
      _
    // Predicated region
    $region6: #{tpu_custom_call.1} parent=1 // pred_check
      _
    $region7: #{tpu_custom_call.1} parent=1 // pred_check_branch
      %27 = sbr.rel (0) target = $region9
    $region8: #{tpu_custom_call.1} parent=1 // pred_region
      %s29 = ssub.s32 256, 256
      %30 = vsyncadd [#allocation6], %s29
      %s31 = sshll.u32 [#allocation5], 4
      %s32 = int_to_ptr.vmem [resolvable:$true] %s31
      %37 = dma.hbm_to_vmem [thread:$0]  %s1, 256, %s32, [#allocation6], 128, 128, 8
    $region9: #{tpu_custom_call.1} parent=1 // pred_fallthru
      _
    // Predicated region
    $region10: #{tpu_custom_call.1} parent=1 // pred_check
      _
    $region11: #{tpu_custom_call.1} parent=1 // pred_check_branch
      %39 = sbr.rel (0) target = $region13
    $region12: #{tpu_custom_call.1} parent=1 // pred_region
      _
    $region13: #{tpu_custom_call.1} parent=1 // pred_fallthru
      _
    // Predicated region
    $region14: #{tpu_custom_call.1} parent=1 // pred_check
      _
    $region15: #{tpu_custom_call.1} parent=1 // pred_check_branch
      %41 = sbr.rel (0) target = $region17
    $region16: #{tpu_custom_call.1} parent=1 // pred_region
      %s43 = ssub.s32 512, 512
      %44 = vsyncadd [#allocation6], %s43
      %s45 = sshll.u32 [#allocation7], 4
      %s46 = int_to_ptr.vmem [resolvable:$true] %s45
      %51 = dma.hbm_to_vmem [thread:$0]  %s3, 512, %s46, [#allocation6], 128, 128, 8
    $region17: #{tpu_custom_call.1} parent=1 // pred_fallthru
      _
    // Predicated region
    $region18: #{tpu_custom_call.1} parent=1 // pred_check
      _
    $region19: #{tpu_custom_call.1} parent=1 // pred_check_branch
      %53 = sbr.rel (0) target = $region21
    $region20: #{tpu_custom_call.1} parent=1 // pred_region
      _
    $region21: #{tpu_custom_call.1} parent=1 // pred_fallthru
      _
    // Predicated region
    $region22: #{tpu_custom_call.1} parent=1 // pred_check
      _
    $region23: #{tpu_custom_call.1} parent=1 // pred_check_branch
      %55 = sbr.rel (0) target = $region25
    $region24: #{tpu_custom_call.1} parent=1 // pred_region
      %s57 = ssub.s32 1024, 1024
      %58 = vsyncadd [#allocation9], %s57
      %s59 = sshll.u32 [#allocation8], 4
      %s60 = int_to_ptr.vmem [resolvable:$true] %s59
      %65 = dma.hbm_to_vmem [thread:$0]  %s5, 1024, %s60, [#allocation9], 128, 128, 8
    $region25: #{tpu_custom_call.1} parent=1 // pred_fallthru
      _
    // Predicated region
    $region26: #{tpu_custom_call.1} parent=1 // pred_check
      _
    $region27: #{tpu_custom_call.1} parent=1 // pred_check_branch
      %67 = sbr.rel (0) target = $region29
    $region28: #{tpu_custom_call.1} parent=1 // pred_region
      _
    $region29: #{tpu_custom_call.1} parent=1 // pred_fallthru
      _
    // Predicated region
    $region30: #{tpu_custom_call.1} parent=1 // pred_check
      _
    $region31: #{tpu_custom_call.1} parent=1 // pred_check_branch
      %69 = sbr.rel (0) target = $region33
    $region32: #{tpu_custom_call.1} parent=1 // pred_region
      %70 = dma.done [#allocation3], 128
    $region33: #{tpu_custom_call.1} parent=1 // pred_fallthru
      _
    // Predicated region
    $region34: #{tpu_custom_call.1} parent=1 // pred_check
      _
    $region35: #{tpu_custom_call.1} parent=1 // pred_check_branch
      %72 = sbr.rel (0) target = $region37
    $region36: #{tpu_custom_call.1} parent=1 // pred_region
      %73 = dma.done [#allocation6], 256
    $region37: #{tpu_custom_call.1} parent=1 // pred_fallthru
      _
    // Predicated region
    $region38: #{tpu_custom_call.1} parent=1 // pred_check
      _
    $region39: #{tpu_custom_call.1} parent=1 // pred_check_branch
      %75 = sbr.rel (0) target = $region41
    $region40: #{tpu_custom_call.1} parent=1 // pred_region
      %76 = dma.done [#allocation6], 512
    $region41: #{tpu_custom_call.1} parent=1 // pred_fallthru
      _
    // Predicated region
    $region42: #{tpu_custom_call.1} parent=1 // pred_check
      _
    $region43: #{tpu_custom_call.1} parent=1 // pred_check_branch
      %78 = sbr.rel (0) target = $region45
    $region44: #{tpu_custom_call.1} parent=1 // pred_region
      %79 = dma.done [#allocation9], 1024
    $region45: #{tpu_custom_call.1} parent=1 // pred_fallthru
      _
    %v80 = vld [vmem:[#allocation2] sm:$0xff]
    %v81 = vld [vmem:[#allocation5] sm:$0xff]
    %v82 = vld [vmem:[#allocation5 + $0x8] sm:$0xff]
    %v83 = vld [vmem:[%s2] sm:$0x1]
    %v85 = vlaneseq
    %v86 = vshrl.u32 %v85, 7
    %v87 = vsub.s32 0, %v86
    %v88 = vrot.slane %v83, %v87
    %vm90 = vcmask 130048
    %v92 = vsel %vm90, %v80, 0
    %94 = vmatprep.subr.mxu0 0.0
    %95 = vmatpush1.msra.mxu0 %v81
    %96 = vmatprep.subr.mxu0 0.0
    %97 = vmatpush1.msra.mxu0 %v82
    %98 = vmatprep.subr.mxu0 0.0
    %99 = vmatpush1.msra.mxu0 0.0
    %100 = vmatprep.subr.mxu0 0.0
    %101 = vmatpush1.msra.mxu0 0.0
    %102 = vmatprep.subr.mxu0 0.0
    %103 = vmatpush1.msra.mxu0 0.0
    %104 = vmatprep.subr.mxu0 0.0
    %105 = vmatpush1.msra.mxu0 0.0
    %106 = vmatprep.subr.mxu0 0.0
    %107 = vmatpush1.msra.mxu0 0.0
    %108 = vmatprep.subr.mxu0 0.0
    %109 = vmatpush1.msra.mxu0 0.0
    %110 = vmatprep.subr.mxu0 0.0
    %111 = vmatpush1.msra.mxu0 0.0
    %112 = vmatprep.subr.mxu0 0.0
    %113 = vmatpush1.msra.mxu0 0.0
    %114 = vmatprep.subr.mxu0 0.0
    %115 = vmatpush1.msra.mxu0 0.0
    %116 = vmatprep.subr.mxu0 0.0
    %117 = vmatpush1.msra.mxu0 0.0
    %118 = vmatprep.subr.mxu0 0.0
    %119 = vmatpush1.msra.mxu0 0.0
    %120 = vmatprep.subr.mxu0 0.0
    %121 = vmatpush1.msra.mxu0 0.0
    %122 = vmatprep.subr.mxu0 0.0
    %123 = vmatpush1.msra.mxu0 0.0
    %124 = vmatprep.subr.mxu0 0.0
    %125 = vmatpush1.msra.mxu0 0.0
    %126 = vmatprep.subr.mxu0 0.0
    %127 = vmatpush1.msra.mxu0 0.0
    %128 = vmatprep.subr.mxu0 0.0
    %129 = vmatpush1.msra.mxu0 0.0
    %130 = vmatprep.subr.mxu0 0.0
    %131 = vmatpush1.msra.mxu0 0.0
    %132 = vmatprep.subr.mxu0 0.0
    %133 = vmatpush1.msra.mxu0 0.0
    %134 = vmatprep.subr.mxu0 0.0
    %135 = vmatpush1.msra.mxu0 0.0
    %136 = vmatprep.subr.mxu0 0.0
    %137 = vmatpush1.msra.mxu0 0.0
    %138 = vmatprep.subr.mxu0 0.0
    %139 = vmatpush1.msra.mxu0 0.0
    %140 = vmatprep.subr.mxu0 0.0
    %141 = vmatpush1.msra.mxu0 0.0
    %142 = vmatprep.subr.mxu0 0.0
    %143 = vmatpush1.msra.mxu0 0.0
    %144 = vmatprep.subr.mxu0 0.0
    %145 = vmatpush1.msra.mxu0 0.0
    %146 = vmatprep.subr.mxu0 0.0
    %147 = vmatpush1.msra.mxu0 0.0
    %148 = vmatprep.subr.mxu0 0.0
    %149 = vmatpush1.msra.mxu0 0.0
    %150 = vmatprep.subr.mxu0 0.0
    %151 = vmatpush1.msra.mxu0 0.0
    %152 = vmatprep.subr.mxu0 0.0
    %153 = vmatpush1.msra.mxu0 0.0
    %154 = vmatprep.subr.mxu0 0.0
    %155 = vmatpush1.msra.mxu0 0.0
    %156 = vmatprep.subr.mxu0 0.0
    %157 = vmatpush1.msra.mxu0 0.0
    %158 = vmatprep.mubr.f32.mxu0 0.0
    %159 = vmatmul.mubr.f32.gmra.mrb[0].mxu0 %v92
    %v160 = vpop.f32.mrb[0].mxu0
    %v161 = vadd.f32 %v88, %v160
    %v162 = vpop.f32.mrb[0].mxu0
    %163 = vdwg.mxu0
    %v164 = vmax.f32 %v161, 0.0
    %v165 = vld [vmem:[#allocation7] sm:$0xff]
    %v166 = vld [vmem:[#allocation7 + $0x8] sm:$0xff]
    %v167 = vld [vmem:[#allocation7 + $0x10] sm:$0xff]
    %v168 = vld [vmem:[#allocation7 + $0x18] sm:$0xff]
    %v169 = vld [vmem:[%s4] sm:$0x1]
    %v171 = vlaneseq
    %v172 = vshrl.u32 %v171, 7
    %v173 = vsub.s32 0, %v172
    %v174 = vrot.slane %v169, %v173
    %vm176 = vcmask 261120
    %v178 = vsel %vm176, %v164, 0
    %180 = vmatprep.subr.mxu0 0.0
    %181 = vmatpush1.msra.mxu0 %v165
    %182 = vmatprep.subr.mxu0 0.0
    %183 = vmatpush1.msra.mxu0 %v166
    %184 = vmatprep.subr.mxu0 0.0
    %185 = vmatpush1.msra.mxu0 %v167
    %186 = vmatprep.subr.mxu0 0.0
    %187 = vmatpush1.msra.mxu0 %v168
    %188 = vmatprep.subr.mxu0 0.0
    %189 = vmatpush1.msra.mxu0 0.0
    %190 = vmatprep.subr.mxu0 0.0
    %191 = vmatpush1.msra.mxu0 0.0
    %192 = vmatprep.subr.mxu0 0.0
    %193 = vmatpush1.msra.mxu0 0.0
    %194 = vmatprep.subr.mxu0 0.0
    %195 = vmatpush1.msra.mxu0 0.0
    %196 = vmatprep.subr.mxu0 0.0
    %197 = vmatpush1.msra.mxu0 0.0
    %198 = vmatprep.subr.mxu0 0.0
    %199 = vmatpush1.msra.mxu0 0.0
    %200 = vmatprep.subr.mxu0 0.0
    %201 = vmatpush1.msra.mxu0 0.0
    %202 = vmatprep.subr.mxu0 0.0
    %203 = vmatpush1.msra.mxu0 0.0
    %204 = vmatprep.subr.mxu0 0.0
    %205 = vmatpush1.msra.mxu0 0.0
    %206 = vmatprep.subr.mxu0 0.0
    %207 = vmatpush1.msra.mxu0 0.0
    %208 = vmatprep.subr.mxu0 0.0
    %209 = vmatpush1.msra.mxu0 0.0
    %210 = vmatprep.subr.mxu0 0.0
    %211 = vmatpush1.msra.mxu0 0.0
    %212 = vmatprep.subr.mxu0 0.0
    %213 = vmatpush1.msra.mxu0 0.0
    %214 = vmatprep.subr.mxu0 0.0
    %215 = vmatpush1.msra.mxu0 0.0
    %216 = vmatprep.subr.mxu0 0.0
    %217 = vmatpush1.msra.mxu0 0.0
    %218 = vmatprep.subr.mxu0 0.0
    %219 = vmatpush1.msra.mxu0 0.0
    %220 = vmatprep.subr.mxu0 0.0
    %221 = vmatpush1.msra.mxu0 0.0
    %222 = vmatprep.subr.mxu0 0.0
    %223 = vmatpush1.msra.mxu0 0.0
    %224 = vmatprep.subr.mxu0 0.0
    %225 = vmatpush1.msra.mxu0 0.0
    %226 = vmatprep.subr.mxu0 0.0
    %227 = vmatpush1.msra.mxu0 0.0
    %228 = vmatprep.subr.mxu0 0.0
    %229 = vmatpush1.msra.mxu0 0.0
    %230 = vmatprep.subr.mxu0 0.0
    %231 = vmatpush1.msra.mxu0 0.0
    %232 = vmatprep.subr.mxu0 0.0
    %233 = vmatpush1.msra.mxu0 0.0
    %234 = vmatprep.subr.mxu0 0.0
    %235 = vmatpush1.msra.mxu0 0.0
    %236 = vmatprep.subr.mxu0 0.0
    %237 = vmatpush1.msra.mxu0 0.0
    %238 = vmatprep.subr.mxu0 0.0
    %239 = vmatpush1.msra.mxu0 0.0
    %240 = vmatprep.subr.mxu0 0.0
    %241 = vmatpush1.msra.mxu0 0.0
    %242 = vmatprep.subr.mxu0 0.0
    %243 = vmatpush1.msra.mxu0 0.0
    %244 = vmatprep.mubr.f32.mxu0 0.0
    %245 = vmatmul.mubr.f32.gmra.mrb[0].mxu0 %v178
    %v246 = vpop.f32.mrb[0].mxu0
    %v247 = vadd.f32 %v174, %v246
    %v248 = vpop.f32.mrb[0].mxu0
    %249 = vdwg.mxu0
    %v250 = vld [vmem:[#allocation8] sm:$0xff]
    %v251 = vld [vmem:[#allocation8 + $0x8] sm:$0xff]
    %v252 = vld [vmem:[#allocation8 + $0x10] sm:$0xff]
    %v253 = vld [vmem:[#allocation8 + $0x18] sm:$0xff]
    %v254 = vld [vmem:[#allocation8 + $0x20] sm:$0xff]
    %v255 = vld [vmem:[#allocation8 + $0x28] sm:$0xff]
    %v256 = vld [vmem:[#allocation8 + $0x30] sm:$0xff]
    %v257 = vld [vmem:[#allocation8 + $0x38] sm:$0xff]
    %v258 = vld [vmem:[%s6] sm:$0x1]
    %v260 = vlaneseq
    %v261 = vshrl.u32 %v260, 7
    %v262 = vsub.s32 0, %v261
    %v263 = vrot.slane %v258, %v262
    %vm265 = vcmask 523264
    %v267 = vsel %vm265, %v247, 0
    %269 = vmatprep.subr.mxu0 0.0
    %270 = vmatpush1.msra.mxu0 %v250
    %271 = vmatprep.subr.mxu0 0.0
    %272 = vmatpush1.msra.mxu0 %v251
    %273 = vmatprep.subr.mxu0 0.0
    %274 = vmatpush1.msra.mxu0 %v252
    %275 = vmatprep.subr.mxu0 0.0
    %276 = vmatpush1.msra.mxu0 %v253
    %277 = vmatprep.subr.mxu0 0.0
    %278 = vmatpush1.msra.mxu0 %v254
    %279 = vmatprep.subr.mxu0 0.0
    %280 = vmatpush1.msra.mxu0 %v255
    %281 = vmatprep.subr.mxu0 0.0
    %282 = vmatpush1.msra.mxu0 %v256
    %283 = vmatprep.subr.mxu0 0.0
    %284 = vmatpush1.msra.mxu0 %v257
    %285 = vmatprep.subr.mxu0 0.0
    %286 = vmatpush1.msra.mxu0 0.0
    %287 = vmatprep.subr.mxu0 0.0
    %288 = vmatpush1.msra.mxu0 0.0
    %289 = vmatprep.subr.mxu0 0.0
    %290 = vmatpush1.msra.mxu0 0.0
    %291 = vmatprep.subr.mxu0 0.0
    %292 = vmatpush1.msra.mxu0 0.0
    %293 = vmatprep.subr.mxu0 0.0
    %294 = vmatpush1.msra.mxu0 0.0
    %295 = vmatprep.subr.mxu0 0.0
    %296 = vmatpush1.msra.mxu0 0.0
    %297 = vmatprep.subr.mxu0 0.0
    %298 = vmatpush1.msra.mxu0 0.0
    %299 = vmatprep.subr.mxu0 0.0
    %300 = vmatpush1.msra.mxu0 0.0
    %301 = vmatprep.subr.mxu0 0.0
    %302 = vmatpush1.msra.mxu0 0.0
    %303 = vmatprep.subr.mxu0 0.0
    %304 = vmatpush1.msra.mxu0 0.0
    %305 = vmatprep.subr.mxu0 0.0
    %306 = vmatpush1.msra.mxu0 0.0
    %307 = vmatprep.subr.mxu0 0.0
    %308 = vmatpush1.msra.mxu0 0.0
    %309 = vmatprep.subr.mxu0 0.0
    %310 = vmatpush1.msra.mxu0 0.0
    %311 = vmatprep.subr.mxu0 0.0
    %312 = vmatpush1.msra.mxu0 0.0
    %313 = vmatprep.subr.mxu0 0.0
    %314 = vmatpush1.msra.mxu0 0.0
    %315 = vmatprep.subr.mxu0 0.0
    %316 = vmatpush1.msra.mxu0 0.0
    %317 = vmatprep.subr.mxu0 0.0
    %318 = vmatpush1.msra.mxu0 0.0
    %319 = vmatprep.subr.mxu0 0.0
    %320 = vmatpush1.msra.mxu0 0.0
    %321 = vmatprep.subr.mxu0 0.0
    %322 = vmatpush1.msra.mxu0 0.0
    %323 = vmatprep.subr.mxu0 0.0
    %324 = vmatpush1.msra.mxu0 0.0
    %325 = vmatprep.subr.mxu0 0.0
    %326 = vmatpush1.msra.mxu0 0.0
    %327 = vmatprep.subr.mxu0 0.0
    %328 = vmatpush1.msra.mxu0 0.0
    %329 = vmatprep.subr.mxu0 0.0
    %330 = vmatpush1.msra.mxu0 0.0
    %331 = vmatprep.subr.mxu0 0.0
    %332 = vmatpush1.msra.mxu0 0.0
    %333 = vmatprep.mubr.f32.mxu0 0.0
    %334 = vmatmul.mubr.f32.gmra.mrb[0].mxu0 %v267
    %v335 = vpop.f32.mrb[0].mxu0
    %v336 = vadd.f32 %v263, %v335
    %v337 = vpop.f32.mrb[0].mxu0
    %338 = vdwg.mxu0
    %339 = vst [vmem:[#allocation10] sm:$0xff] %v336
    // Predicated region
    $region46: #{tpu_custom_call.1} parent=1 // pred_check
      _
    $region47: #{tpu_custom_call.1} parent=1 // pred_check_branch
      %341 = sbr.rel (0) target = $region49
    $region48: #{tpu_custom_call.1} parent=1 // pred_region
      %s343 = ssub.s32 128, 128
      %344 = vsyncadd [#allocation4], %s343
      %s346 = sshll.u32 [#allocation10], 4
      %s347 = int_to_ptr.vmem [resolvable:$true] %s346
      %349 = dma.vmem_to_hbm [thread:$0]  %s347, 128, %s7, [#allocation4]
    $region49: #{tpu_custom_call.1} parent=1 // pred_fallthru
      _
    // Predicated region
    $region50: #{tpu_custom_call.1} parent=1 // pred_check
      _
    $region51: #{tpu_custom_call.1} parent=1 // pred_check_branch
      %351 = sbr.rel (0) target = $region53
    $region52: #{tpu_custom_call.1} parent=1 // pred_region
      %352 = dma.done [#allocation4], 128
    $region53: #{tpu_custom_call.1} parent=1 // pred_fallthru
      _
    %353 = vsyncpa [#allocation3], 1
    %354 = vsyncpa [#allocation6], 1
    %355 = vsyncpa [#allocation9], 1
    %356 = vsyncpa [#allocation4], 1

</llo_original>
